<compile_context>
chip_gen: v6e
topology: v6e:2x2x1
jax: 0.10.0
libtpu: 0.0.40
codegen_flags: <defaults>
</compile_context>

<pallas_src>
import functools
import math
import numpy as np

import jax
import jax.numpy as jnp
from jax.experimental import pallas as pl
from jax.experimental.pallas import tpu as pltpu


def _cdiv(a, b):
    return -(-a // b)


def _rup(a, b):
    return _cdiv(a, b) * b


# --------------------------------------------------------------------------
# Parameter construction (mirrors CQT.__init__).
# TODO(synk): librosa.filters.constant_q is replaced by an in-script,
# deterministic hann-windowed complex-exponential filter bank with the same
# lengths / grouping logic (no checkpoint / librosa dependency).
# --------------------------------------------------------------------------
def build_cqt_params(sr=16000, fmin=500.0, n_bins=16, bins_per_octave=8,
                     filter_scale=1.0, hop_length=128):
    Q = float(filter_scale) / (2.0 ** (1.0 / bins_per_octave) - 1.0)
    freqs = fmin * (2.0 ** (np.arange(n_bins) / bins_per_octave))
    lengths = Q * sr / freqs                               # decreasing with bin index
    filter_length = int(2 ** math.ceil(np.log2(lengths.max())))

    # synthetic deterministic complex CQT filters, centered in filter_length,
    # L1-normalized (librosa-like).
    cqt_filters = np.zeros((n_bins, filter_length), dtype=np.complex128)
    for k in range(n_bins):
        l = int(np.ceil(lengths[k]))
        n = np.arange(l) - (l - 1) / 2.0
        win = 0.5 - 0.5 * np.cos(2.0 * np.pi * np.arange(l) / max(l - 1, 1))
        sig = win * np.exp(2j * np.pi * freqs[k] * n / sr)
        sig = sig / np.abs(sig).sum()
        start = (filter_length - l) // 2
        cqt_filters[k, start:start + l] = sig

    # group bins by conv kernel size (identical logic to the torch module)
    conv_kernel_sizes = []
    conv_index_ranges = []
    current_kernel_size = None
    last_change_index = 0
    for i, l in enumerate(lengths):
        kernel_size = 2 ** math.ceil(np.log2(l))
        if current_kernel_size is not None and kernel_size >= current_kernel_size:
            continue
        conv_kernel_sizes.append(kernel_size)
        current_kernel_size = kernel_size
        if i != 0:
            conv_index_ranges.append(range(last_change_index, i))
        last_change_index = i
    conv_index_ranges.append(range(last_change_index, len(lengths)))

    # per-group truncated filters, real||imag stacked -> exactly each Conv1d weight
    group_filters = []
    for size, rng in zip(conv_kernel_sizes, conv_index_ranges):
        offset = (filter_length - size) // 2
        idx = list(rng)
        if offset > 0:
            f = cqt_filters[idx, offset:filter_length - offset]
        else:
            f = cqt_filters[idx, :]
        group_filters.append(
            np.concatenate([np.real(f), np.imag(f)], axis=0).astype(np.float32))

    return conv_kernel_sizes, conv_index_ranges, group_filters, filter_length


def build_unified_weight(conv_kernel_sizes, conv_index_ranges, group_filters,
                         filter_length, n_bins):
    """Re-embed each group's (truncated) kernel centered in the widest window.

    Valid because all group kernel sizes are (even) powers of two, so
    padding = size // 2 exactly centers every group at t * hop.
    """
    W = np.zeros((2 * n_bins, filter_length), dtype=np.float32)
    for size, rng, gf in zip(conv_kernel_sizes, conv_index_ranges, group_filters):
        assert (filter_length - size) % 2 == 0, "group kernels must center exactly"
        off = (filter_length - size) // 2
        idx = np.array(list(rng))
        g = len(idx)
        W[idx, off:off + size] = gf[:g]            # real rows
        W[idx + n_bins, off:off + size] = gf[g:]   # imag rows
    return W


# --------------------------------------------------------------------------
# Pallas kernel.
#   o[n, m] = sum_j sum_r W[n, j*hop + r] * xb[t0 + m + j, r]
# computed, per lane chunk of cm frames, as ONE stacked MXU matmul
#   P = Ws @ Xw^T,  Ws: (n_shifts*N, hop),  Xw: (cm + halo, hop)
# followed by n_shifts cheap XLU lane rotations (shift alignment) and adds.
# --------------------------------------------------------------------------
def _cqt_kernel(ws_ref, xm_ref, xh_ref, o_ref, xtail_ref, *,
                n_shifts, n_out, cm, halo):
    # ws_ref    : (n_shifts*N, hop)  shift-stacked filter bank (bf16), VMEM-resident
    # xm_ref    : (tm, hop)          main hop-blocks of this tile (bf16)
    # xh_ref    : (halo, hop)        first `halo` blocks of the next tile
    # o_ref     : (N, tm)            lane-dense output tile (frames on lane axis)
    # xtail_ref : (cm + halo, hop)   scratch: contiguous window for the last chunk
    tm = o_ref.shape[1]
    nc = tm // cm
    cw = cm + halo

    # Stitch the last chunk's window once per grid step (only place where the
    # main block and the halo block must be contiguous).  No jnp.concatenate.
    xtail_ref[:cm, :] = xm_ref[pl.ds(tm - cm, cm), :]
    xtail_ref[cm:, :] = xh_ref[...]

    for c in range(nc):                              # static unroll, nc is small
        if c < nc - 1:
            # window lies entirely inside the main block (halo <= cm)
            xw = xm_ref[pl.ds(c * cm, cw), :]
        else:
            xw = xtail_ref[...]
        # Single stacked MXU call: (n_shifts*N, hop) x (cw, hop)^T -> (n_shifts*N, cw)
        p = jax.lax.dot_general(ws_ref[...], xw, (((1,), (1,)), ((), ())),
                                preferred_element_type=jnp.float32)
        # Reduce the n_shifts row groups.  roll by (cw - j) == roll(-j) aligns
        # shift j's frames with shift 0's; lane rotation runs on the XLU.
        # TODO(synk): for configs with many shifts (n_shifts >= ~16) switch this
        # static unroll to a fori_loop over shift groups to bound code size.
        acc = p[:n_out, :cm]
        for j in range(1, n_shifts):
            pj = p[j * n_out:(j + 1) * n_out, :]
            acc = acc + pltpu.roll(pj, cw - j, 1)[:, :cm]
        o_ref[:, c * cm:(c + 1) * cm] = acc.astype(o_ref.dtype)


def cqt_forward(x, W, hop_length, filter_length, n_bins, *,
                tm=1024, cm=512,
                compute_dtype=jnp.bfloat16, out_dtype=jnp.float32):
    """x: (B, 1, T) float32 -> (B, n_bins, T_out, 2) (PyTorch CQT semantics).

    compute_dtype=bf16 uses the fast MXU path with f32 accumulation; pass
    jnp.float32 for a tighter precision contract.  out_dtype=bf16 halves the
    output HBM traffic (useful on v5e/v6e) when downstream tolerates it.
    """
    B, C, T = x.shape
    assert C == 1
    S, hop = int(filter_length), int(hop_length)
    assert S % hop == 0, "block decomposition requires filter_length % hop == 0"
    n_shifts = S // hop
    pad = S // 2
    N = 2 * n_bins
    T_out = (T + 2 * pad - S) // hop + 1          # identical for every conv group

    # Halo: how many blocks past its own block a frame reaches (n_shifts - 1),
    # rounded up to full 128-row blocks for aligned DMAs / rolls (>= 16 anyway).
    halo = max(128, _rup(max(n_shifts - 1, 1), 128))

    # Output frames sit on the 128-lane axis -> tile must be a multiple of 128
    # (and of halo, for the halo block indexing).
    tm = max(128, min(int(tm), _rup(T_out, 128)))
    tm = _rup(tm, halo)
    # Keep enough grid steps so both TensorCores (v7x megacore) stay busy.
    while (tm > 256 and (tm // 2) % halo == 0
           and B * _cdiv(T_out, tm) < 8):
        tm //= 2

    n_tiles = _cdiv(T_out, tm)
    T_out_pad = n_tiles * tm

    # Lane chunk inside the kernel: largest multiple of halo dividing tm that
    # does not exceed the requested cm -> f32 accumulator stays <= (N, cm).
    cm_target = max(int(cm), halo)
    cm = halo
    for cand in range(halo, min(cm_target, tm) + 1, halo):
        if tm % cand == 0:
            cm = cand

    n_blocks = T_out_pad + halo
    Lp = n_blocks * hop
    right_pad = Lp - pad - T
    assert right_pad >= 0

    # Blocked (de-duplicated) signal: xb[b, r, :] = x_padded[b, r*hop:(r+1)*hop].
    xb = jnp.pad(x[:, 0, :], ((0, 0), (pad, right_pad)))
    xb = xb.reshape(B, n_blocks, hop).astype(compute_dtype)

    # Shift-stacked filter bank: ws[j*N + n, r] = W[n, j*hop + r]  (host-side).
    SN = n_shifts * N
    ws = np.asarray(W, np.float32).reshape(N, n_shifts, hop)
    ws = np.ascontiguousarray(ws.transpose(1, 0, 2)).reshape(SN, hop)
    ws = jnp.asarray(ws, dtype=compute_dtype)

    kernel = functools.partial(_cqt_kernel, n_shifts=n_shifts, n_out=N,
                               cm=cm, halo=halo)
    out = pl.pallas_call(
        kernel,
        out_shape=jax.ShapeDtypeStruct((B, N, T_out_pad), out_dtype),
        grid_spec=pltpu.PrefetchScalarGridSpec(
            num_scalar_prefetch=0,
            grid=(B, n_tiles),
            in_specs=[
                # W: constant block index -> fetched once, stays VMEM-resident.
                pl.BlockSpec((SN, hop), lambda b, i: (0, 0)),
                # main tm hop-blocks of this tile
                pl.BlockSpec((None, tm, hop), lambda b, i: (b, i, 0)),
                # halo: first `halo` blocks of the next tile (same array)
                pl.BlockSpec((None, halo, hop),
                             lambda b, i: (b, (i + 1) * (tm // halo), 0)),
            ],
            out_specs=pl.BlockSpec((None, N, tm), lambda b, i: (b, 0, i)),
            scratch_shapes=[pltpu.VMEM((cm + halo, hop), compute_dtype)],
        ),
        compiler_params=pltpu.CompilerParams(
            dimension_semantics=("parallel", "parallel")),
    )(ws, xb, xb)

    out = out[:, :, :T_out].astype(jnp.float32)                   # (B, 2*n_bins, T_out)
    # real/imag are row (sublane) slices -> no transposes needed.
    return jnp.stack([out[:, :n_bins, :], out[:, n_bins:, :]], axis=3)


# --------------------------------------------------------------------------
# Pure numpy reference that mirrors the PyTorch forward() exactly
# (per-group strided Conv1d with padding = size // 2, chunk, cat, stack).
# --------------------------------------------------------------------------
def reference_forward(x_np, group_filters, conv_kernel_sizes, hop):
    B, _, T = x_np.shape
    reals, imags = [], []
    for filt, s in zip(group_filters, conv_kernel_sizes):
        padw = s // 2
        xp = np.pad(x_np[:, 0, :], ((0, 0), (padw, padw)))
        T_out = (T + 2 * padw - s) // hop + 1
        out = np.zeros((B, filt.shape[0], T_out), dtype=np.float32)
        for t in range(T_out):
            win = xp[:, t * hop: t * hop + s]
            out[:, :, t] = win.astype(np.float32) @ filt.T
        g = filt.shape[0] // 2
        reals.append(out[:, :g])
        imags.append(out[:, g:])
    real = np.concatenate(reals, axis=1)
    imag = np.concatenate(imags, axis=1)
    return np.stack([real, imag], axis=3)


if __name__ == "__main__":
    # small, but structurally identical to the module (several kernel-size groups)
    sr, fmin, n_bins, bpo, fscale, hop = 16000, 500.0, 16, 8, 1.0, 128
    sizes, ranges, gfilters, flen = build_cqt_params(sr, fmin, n_bins, bpo, fscale, hop)
    W = build_unified_weight(sizes, ranges, gfilters, flen, n_bins)

    B, T = 2, 2048
    x = jax.random.normal(jax.random.PRNGKey(0), (B, 1, T), dtype=jnp.float32)

    y = jax.block_until_ready(cqt_forward(x, W, hop, flen, n_bins))

    y_ref = reference_forward(np.asarray(x), gfilters, sizes, hop)
    assert y.shape == y_ref.shape, (y.shape, y_ref.shape)
    # bf16 operands with f32 MXU accumulation -> slightly looser tol than pure f32.
    np.testing.assert_allclose(np.asarray(y), y_ref, rtol=2e-2, atol=2e-3)

    print("KERNEL_OK")
</pallas_src>

<mosaic_0001>
module attributes {stable_mosaic.version = 11 : i64} {
  func.func @_cqt_kernel(%arg0: i32, %arg1: i32, %arg2: memref<128x128xbf16, #tpu.memory_space<vmem>>, %arg3: memref<1x128x128xbf16, #tpu.memory_space<vmem>>, %arg4: memref<1x128x128xbf16, #tpu.memory_space<vmem>>, %arg5: memref<1x32x128xf32, #tpu.memory_space<vmem>>, %arg6: memref<256x128xbf16, #tpu.memory_space<vmem>>) attributes {dimension_semantics = [#tpu.dimension_semantics<parallel>, #tpu.dimension_semantics<parallel>], iteration_bounds = array<i64: 2, 1>, scalar_prefetch = 0 : i64, scratch_operands = 1 : i64, tpu.core_type = #tpu.core_type<tc>, window_params = [{pipeline_mode = #tpu.pipeline_mode<synchronous>, transform_indices = @transform_0, window_bounds = array<i64: 128, 128>}, {transform_indices = @transform_1, window_bounds = array<i64: 1, 128, 128>}, {transform_indices = @transform_2, window_bounds = array<i64: 1, 128, 128>}, {transform_indices = @transform_3, window_bounds = array<i64: 1, 32, 128>}]} {
    %c0 = arith.constant 0 : index
    %c0_0 = arith.constant 0 : index
    %c0_1 = arith.constant 0 : index
    %0 = vector.load %arg3[%c0, %c0_0, %c0_1] : memref<1x128x128xbf16, #tpu.memory_space<vmem>>, vector<1x128x128xbf16>
    %1 = vector.shape_cast %0 : vector<1x128x128xbf16> to vector<128x128xbf16>
    %c0_2 = arith.constant 0 : index
    %c0_3 = arith.constant 0 : index
    %2 = vector.load %arg6[%c0_2, %c0_3] : memref<256x128xbf16, #tpu.memory_space<vmem>>, vector<128x128xbf16>
    tpu.vector_store %arg6[%c0_2, %c0_3], %1 {strides = array<i32>} : memref<256x128xbf16, #tpu.memory_space<vmem>>, vector<128x128xbf16>,
    %c0_4 = arith.constant 0 : index
    %c0_5 = arith.constant 0 : index
    %c0_6 = arith.constant 0 : index
    %3 = vector.load %arg4[%c0_4, %c0_5, %c0_6] : memref<1x128x128xbf16, #tpu.memory_space<vmem>>, vector<1x128x128xbf16>
    %4 = vector.shape_cast %3 : vector<1x128x128xbf16> to vector<128x128xbf16>
    %c128 = arith.constant 128 : index
    %c0_7 = arith.constant 0 : index
    %5 = vector.load %arg6[%c128, %c0_7] : memref<256x128xbf16, #tpu.memory_space<vmem>>, vector<128x128xbf16>
    tpu.vector_store %arg6[%c128, %c0_7], %4 {strides = array<i32>} : memref<256x128xbf16, #tpu.memory_space<vmem>>, vector<128x128xbf16>,
    %c0_8 = arith.constant 0 : index
    %c0_9 = arith.constant 0 : index
    %6 = vector.load %arg6[%c0_8, %c0_9] : memref<256x128xbf16, #tpu.memory_space<vmem>>, vector<256x128xbf16>
    %c0_10 = arith.constant 0 : index
    %c0_11 = arith.constant 0 : index
    %7 = vector.load %arg2[%c0_10, %c0_11] : memref<128x128xbf16, #tpu.memory_space<vmem>>, vector<128x128xbf16>
    %cst = arith.constant dense<0.000000e+00> : vector<128x256xf32>
    %8 = tpu.matmul %7, %6, %cst {dimension_numbers = #tpu.dot_dimension_numbers<[1], [1], [0], [0], [0, 0, 1, 0], [], []>} : vector<128x128xbf16>, vector<256x128xbf16>, vector<128x256xf32> -> vector<128x256xf32>
    %9 = vector.extract_strided_slice %8 {offsets = [0, 0], sizes = [32, 128], strides = [1, 1]} : vector<128x256xf32> to vector<32x128xf32>
    %10 = vector.extract_strided_slice %8 {offsets = [32, 0], sizes = [32, 256], strides = [1, 1]} : vector<128x256xf32> to vector<32x256xf32>
    %c255_i32 = arith.constant 255 : i32
    %11 = tpu.dynamic_rotate %10 by %c255_i32 dim 1 : vector<32x256xf32>, i32 -> vector<32x256xf32>
    %12 = vector.extract_strided_slice %11 {offsets = [0, 0], sizes = [32, 128], strides = [1, 1]} : vector<32x256xf32> to vector<32x128xf32>
    %13 = arith.addf %9, %12 : vector<32x128xf32>
    %14 = vector.extract_strided_slice %8 {offsets = [64, 0], sizes = [32, 256], strides = [1, 1]} : vector<128x256xf32> to vector<32x256xf32>
    %c254_i32 = arith.constant 254 : i32
    %15 = tpu.dynamic_rotate %14 by %c254_i32 dim 1 : vector<32x256xf32>, i32 -> vector<32x256xf32>
    %16 = vector.extract_strided_slice %15 {offsets = [0, 0], sizes = [32, 128], strides = [1, 1]} : vector<32x256xf32> to vector<32x128xf32>
    %17 = arith.addf %13, %16 : vector<32x128xf32>
    %18 = vector.extract_strided_slice %8 {offsets = [96, 0], sizes = [32, 256], strides = [1, 1]} : vector<128x256xf32> to vector<32x256xf32>
    %c253_i32 = arith.constant 253 : i32
    %19 = tpu.dynamic_rotate %18 by %c253_i32 dim 1 : vector<32x256xf32>, i32 -> vector<32x256xf32>
    %20 = vector.extract_strided_slice %19 {offsets = [0, 0], sizes = [32, 128], strides = [1, 1]} : vector<32x256xf32> to vector<32x128xf32>
    %21 = arith.addf %17, %20 : vector<32x128xf32>
    %c0_12 = arith.constant 0 : index
    %c0_13 = arith.constant 0 : index
    %c0_14 = arith.constant 0 : index
    %22 = vector.load %arg5[%c0_12, %c0_13, %c0_14] : memref<1x32x128xf32, #tpu.memory_space<vmem>>, vector<1x32x128xf32>
    %23 = vector.shape_cast %22 : vector<1x32x128xf32> to vector<32x128xf32>
    %24 = vector.shape_cast %21 : vector<32x128xf32> to vector<1x32x128xf32>
    tpu.vector_store %arg5[%c0_12, %c0_13, %c0_14], %24 {strides = array<i32>} : memref<1x32x128xf32, #tpu.memory_space<vmem>>, vector<1x32x128xf32>,
    return
  }
  func.func @transform_0(%arg0: i32, %arg1: i32) -> (i32, i32) {
    %c0_i32 = arith.constant 0 : i32
    %c0_i32_0 = arith.constant 0 : i32
    %c0_i32_1 = arith.constant 0 : i32
    return %c0_i32, %c0_i32_0 : i32, i32
  }
  func.func @transform_1(%arg0: i32, %arg1: i32) -> (i32, i32, i32) {
    %c0_i32 = arith.constant 0 : i32
    %c0_i32_0 = arith.constant 0 : i32
    return %arg0, %arg1, %c0_i32 : i32, i32, i32
  }
  func.func @transform_2(%arg0: i32, %arg1: i32) -> (i32, i32, i32) {
    %c1_i32 = arith.constant 1 : i32
    %0 = arith.addi %arg1, %c1_i32 : i32
    %c1_i32_0 = arith.constant 1 : i32
    %1 = arith.muli %0, %c1_i32_0 : i32
    %c0_i32 = arith.constant 0 : i32
    %c0_i32_1 = arith.constant 0 : i32
    return %arg0, %1, %c0_i32 : i32, i32, i32
  }
  func.func @transform_3(%arg0: i32, %arg1: i32) -> (i32, i32, i32) {
    %c0_i32 = arith.constant 0 : i32
    %c0_i32_0 = arith.constant 0 : i32
    return %arg0, %c0_i32, %arg1 : i32, i32, i32
  }
}

</mosaic_0001>

<llo_original>
// kernel: tpu_custom_call.1
$region0: #{tpu_custom_call.1}
  #allocation0 [shape = 'u32[]', space=smem, size = 0x4, offset = 0x4, fixed_abs, tag = 'smem constant byte address 0x4 - core index']
  #allocation1 [shape = 'u32[144,128]{1,0:T(1,128)}', space=vmem, size = 0x12000, scoped, tag = 'internal scratch']
  #allocation2 [shape = 'bf16[256,128]{1,0:T(8,128)(2,1)}', space=vmem, size = 0x10000, scoped, tag = 'scratch operand']
  %s0 = inlined_call_operand.hbm [shape: bf16[128,128], index: 0, kind: input, shape index: {}]
  %s1 = inlined_call_operand.hbm [shape: bf16[2,256,128], index: 1, kind: input, shape index: {}]
  %s2 = inlined_call_operand.hbm [shape: bf16[2,256,128], index: 2, kind: input, shape index: {}]
  %s3 = inlined_call_operand.hbm [shape: f32[2,32,128], index: 3, kind: output, shape index: {}]
  %s4 = sld [smem:[#allocation0]]
  $region57: #{tpu_custom_call.1} parent=0
    _
  %s6 = ssub.s32 1, %s4
  %s7 = scalar_select 0, %s6, %s4
  $region1: #{tpu_custom_call.1} parent=0
    #allocation3 [shape = 'u8[32768]{0}', space=vmem, size = 0x8000, scoped, tag = 'input window, operand 0, single buffered']
    #allocation4 [shape = 's32[2]{0}', space=sflag, size = 0x8, scoped, tag = 'scoped memory for tpu_custom_call.1']
    #allocation5 [shape = 's32[2]{0}', space=sflag, size = 0x8, scoped, tag = 'scoped memory for tpu_custom_call.1']
    #allocation6 [shape = 'u8[65536]{0}', space=vmem, size = 0x10000, scoped, tag = 'input window, operand 1']
    #allocation7 [shape = 's32[2]{0}', space=sflag, size = 0x8, scoped, tag = 'scoped memory for tpu_custom_call.1']
    #allocation8 [shape = 'u8[65536]{0}', space=vmem, size = 0x10000, scoped, tag = 'input window, operand 2']
    #allocation9 [shape = 'u8[32768]{0}', space=vmem, size = 0x8000, scoped, tag = 'output window, operand 0']
    %8 = vsyncpa [#allocation4], 0
    %9 = vsyncpa [#allocation7], 0
    %s10 = scalar_lea.sflag [#allocation7], 1
    %11 = vsyncpa %s10, 0
    %12 = vsyncpa [#allocation5], 0
    %s13 = scalar_lea.sflag [#allocation5], 1
    %14 = vsyncpa %s13, 0
    loop: start=0, step=1, limit=4
    $region2: #{tpu_custom_call.1} parent=1 // loop_pre_header
      _
    $region3: #{tpu_custom_call.1} parent=1 // loop_header
      %s16 = sphi 0, %s20
      %p17 = scmp.ge.s32.totalorder %s16, 4
      %s23 = sphi 0, %s35
      %s24 = sphi 0, %s31
      %s25 = sphi 0, %s23
      %s26 = sphi 0, %s24
      %s27 = sphi 0, %s25
      %s28 = sphi 0, %s26
      %s36 = sphi 0, %s36
      %s38 = sphi 0, %s36
      %s39 = sphi 0, %s38
      %s53 = sphi 0, %s39
      %s61 = sphi 0, %s63
      %s64 = sphi 0, %s61
      %s65 = sphi 0, %s64
      %s81 = sphi 0, %s65
      %s91 = sphi 0, %s93
      %s94 = sphi 0, %s91
      %s95 = sphi 0, %s94
      %s111 = sphi 0, %s95
      %s119 = sphi 0, %s121
      %s122 = sphi 0, %s119
      %s123 = sphi 0, %s122
      %s139 = sphi 0, %s123
    $region4: #{tpu_custom_call.1} parent=1 // loop_header_branch
      %19 = sbr.rel (%p17) target = $region8
    $region5: #{tpu_custom_call.1} parent=1 // loop_body
      %s21 = ssub.s32 %s16, 1
      %s22 = ssub.s32 %s16, 2
      %s29 = sadd.s32 1, %s24
      %p30 = scmp.ge.s32.totalorder %s29, 1
      %s31 = scalar_select %p30, 0, %s29
      %s32 = sadd.s32 1, %s23
      %s33 = scalar_select %p30, %s32, %s23
      %p34 = scmp.ge.s32.totalorder %s33, 2
      %s35 = scalar_select %p34, 0, %s33
      %s37 = sadd.s32 %s36, 1
      %p40 = scmp.eq.s32.totalorder %s16, 1
      %p41 = scmp.ne.s32.totalorder %s36, %s38
      %p42 = scmp.eq.s32.totalorder %s16, 0
      %p43 = por %p41, %p42
      %p44 = scmp.ne.s32.totalorder %s36, %s38
      %p45 = scmp.eq.s32.totalorder %s21, 1
      %p46 = por %p44, %p45
      %p47 = scmp.ne.s32.totalorder %s38, %s39
      %p48 = scmp.eq.s32.totalorder %s21, 0
      %p49 = por %p47, %p48
      %p50 = scmp.ne.s32.totalorder %s38, %s39
      %p51 = scmp.eq.s32.totalorder %s22, 1
      %p52 = por %p50, %p51
      %p54 = scmp.ne.s32.totalorder %s39, %s53
      %p55 = scmp.eq.s32.totalorder %s22, 0
      %p56 = por %p54, %p55
      %s57 = ssub.s32 %s23, %s35
      %s58 = ssub.s32 %s24, %s31
      %s59 = sor.u32 %s57, %s58
      %p60 = scmp.eq.s32.totalorder %s59, 0
      %s62 = sadd.s32 %s61, 1
      %s63 = scalar_select %p60, %s61, %s62
      %p66 = pneg %p60
      %p67 = scmp.eq.s32.totalorder %s16, 1
      %p68 = por %p66, %p67
      %p69 = scmp.ne.s32.totalorder %s61, %s64
      %p70 = scmp.eq.s32.totalorder %s16, 0
      %p71 = por %p69, %p70
      %p72 = scmp.ne.s32.totalorder %s61, %s64
      %p73 = scmp.eq.s32.totalorder %s21, 1
      %p74 = por %p72, %p73
      %p75 = scmp.ne.s32.totalorder %s64, %s65
      %p76 = scmp.eq.s32.totalorder %s21, 0
      %p77 = por %p75, %p76
      %p78 = scmp.ne.s32.totalorder %s64, %s65
      %p79 = scmp.eq.s32.totalorder %s22, 1
      %p80 = por %p78, %p79
      %p82 = scmp.ne.s32.totalorder %s65, %s81
      %p83 = scmp.eq.s32.totalorder %s22, 0
      %p84 = por %p82, %p83
      %s85 = sadd.s32 %s24, 1
      %s86 = sadd.s32 %s31, 1
      %s87 = ssub.s32 %s23, %s35
      %s88 = ssub.s32 %s85, %s86
      %s89 = sor.u32 %s87, %s88
      %p90 = scmp.eq.s32.totalorder %s89, 0
      %s92 = sadd.s32 %s91, 1
      %s93 = scalar_select %p90, %s91, %s92
      %p96 = pneg %p90
      %p97 = scmp.eq.s32.totalorder %s16, 1
      %p98 = por %p96, %p97
      %p99 = scmp.ne.s32.totalorder %s91, %s94
      %p100 = scmp.eq.s32.totalorder %s16, 0
      %p101 = por %p99, %p100
      %p102 = scmp.ne.s32.totalorder %s91, %s94
      %p103 = scmp.eq.s32.totalorder %s21, 1
      %p104 = por %p102, %p103
      %p105 = scmp.ne.s32.totalorder %s94, %s95
      %p106 = scmp.eq.s32.totalorder %s21, 0
      %p107 = por %p105, %p106
      %p108 = scmp.ne.s32.totalorder %s94, %s95
      %p109 = scmp.eq.s32.totalorder %s22, 1
      %p110 = por %p108, %p109
      %p112 = scmp.ne.s32.totalorder %s95, %s111
      %p113 = scmp.eq.s32.totalorder %s22, 0
      %p114 = por %p112, %p113
      %s115 = ssub.s32 %s23, %s35
      %s116 = ssub.s32 %s24, %s31
      %s117 = sor.u32 %s115, %s116
      %p118 = scmp.eq.s32.totalorder %s117, 0
      %s120 = sadd.s32 %s119, 1
      %s121 = scalar_select %p118, %s119, %s120
      %p124 = pneg %p118
      %p125 = scmp.eq.s32.totalorder %s16, 1
      %p126 = por %p124, %p125
      %p127 = scmp.ne.s32.totalorder %s119, %s122
      %p128 = scmp.eq.s32.totalorder %s16, 0
      %p129 = por %p127, %p128
      %p130 = scmp.ne.s32.totalorder %s119, %s122
      %p131 = scmp.eq.s32.totalorder %s21, 1
      %p132 = por %p130, %p131
      %p133 = scmp.ne.s32.totalorder %s122, %s123
      %p134 = scmp.eq.s32.totalorder %s21, 0
      %p135 = por %p133, %p134
      %p136 = scmp.ne.s32.totalorder %s122, %s123
      %p137 = scmp.eq.s32.totalorder %s22, 1
      %p138 = por %p136, %p137
      %p140 = scmp.ne.s32.totalorder %s123, %s139
      %p141 = scmp.eq.s32.totalorder %s22, 0
      %p142 = por %p140, %p141
      %p143 = scmp.le.s32.totalorder 1, %s16
      %p144 = scmp.lt.s32.totalorder %s16, 3
      %p145 = pnand %p143, %p144
      %p146 = pneg %p145
      // Predicated region
      $region9: #{tpu_custom_call.1} parent=5 // pred_check
        _
      $region10: #{tpu_custom_call.1} parent=5 // pred_check_branch
        %148 = sbr.rel (%p145) target = $region12
      $region11: #{tpu_custom_call.1} parent=5 // pred_region
        %s149 = ssub.s32 %s16, 1
        // Predicated region
        $region13: #{tpu_custom_call.1} parent=11 // pred_check
          %p150 = pneg %p49
        $region14: #{tpu_custom_call.1} parent=11 // pred_check_branch
          %152 = sbr.rel (%p150) target = $region16
        $region15: #{tpu_custom_call.1} parent=11 // pred_region
          %s154 = ssub.s32 1024, 1024
          %155 = vsyncadd [#allocation4], %s154
          %s156 = sshll.u32 [#allocation3], 4
          %s157 = int_to_ptr.vmem [resolvable:$true] %s156
          %162 = dma.hbm_to_vmem [thread:$0]  %s0, 1024, %s157, [#allocation4], 64, 64, 4
        $region16: #{tpu_custom_call.1} parent=11 // pred_fallthru
          _
      $region12: #{tpu_custom_call.1} parent=5 // pred_fallthru
        _
      %p163 = scmp.lt.s32.totalorder %s16, 2
      // Predicated region
      $region17: #{tpu_custom_call.1} parent=5 // pred_check
        %p164 = pneg %p163
      $region18: #{tpu_custom_call.1} parent=5 // pred_check_branch
        %166 = sbr.rel (%p164) target = $region20
      $region19: #{tpu_custom_call.1} parent=5 // pred_region
        // Predicated region
        $region21: #{tpu_custom_call.1} parent=19 // pred_check
          %p167 = pneg %p71
        $region22: #{tpu_custom_call.1} parent=19 // pred_check_branch
          %169 = sbr.rel (%p167) target = $region24
        $region23: #{tpu_custom_call.1} parent=19 // pred_region
          %s170 = sand.u32 %s16, 1
          %s171 = scalar_lea.sflag [#allocation7], %s170
          %s172 = sand.u32 %s61, 1
          %s173 = smul.addr %s172, 64
          %s174 = scalar_lea.vmem [#allocation6], %s173
          %s175 = smul.u32 16, %s24
          %s177 = ssub.s32 1024, 1024
          %178 = vsyncadd %s171, %s177
          %s179 = smul.addr %s23, 32
          %s180 = sadd.s32 %s175, %s179
          %s181 = smul.addr %s180, 64
          %s182 = scalar_lea.hbm %s1, %s181
          %s183 = sshll.u32 %s174, 4
          %s184 = int_to_ptr.vmem [resolvable:$true] %s183
          %189 = dma.hbm_to_vmem [thread:$0]  %s182, 1024, %s184, %s171, 64, 64, 4
        $region24: #{tpu_custom_call.1} parent=19 // pred_fallthru
          _
        // Predicated region
        $region25: #{tpu_custom_call.1} parent=19 // pred_check
          %p190 = pneg %p101
        $region26: #{tpu_custom_call.1} parent=19 // pred_check_branch
          %192 = sbr.rel (%p190) target = $region28
        $region27: #{tpu_custom_call.1} parent=19 // pred_region
          %s193 = sand.u32 %s16, 1
          %s194 = scalar_lea.sflag [#allocation7], %s193
          %s195 = sand.u32 %s91, 1
          %s196 = smul.addr %s195, 64
          %s197 = scalar_lea.vmem [#allocation8], %s196
          %s198 = sadd.s32 %s24, 1
          %s199 = smul.u32 16, %s198
          %s201 = ssub.s32 1024, 1024
          %202 = vsyncadd %s194, %s201
          %s203 = smul.addr %s23, 32
          %s204 = sadd.s32 %s199, %s203
          %s205 = smul.addr %s204, 64
          %s206 = scalar_lea.hbm %s2, %s205
          %s207 = sshll.u32 %s197, 4
          %s208 = int_to_ptr.vmem [resolvable:$true] %s207
          %213 = dma.hbm_to_vmem [thread:$0]  %s206, 1024, %s208, %s194, 64, 64, 4
        $region28: #{tpu_custom_call.1} parent=19 // pred_fallthru
          _
      $region20: #{tpu_custom_call.1} parent=5 // pred_fallthru
        _
      %p214 = scmp.le.s32.totalorder 1, %s16
      %p215 = scmp.lt.s32.totalorder %s16, 3
      %p216 = pnand %p214, %p215
      %p217 = pneg %p216
      // Predicated region
      $region29: #{tpu_custom_call.1} parent=5 // pred_check
        _
      $region30: #{tpu_custom_call.1} parent=5 // pred_check_branch
        %219 = sbr.rel (%p216) target = $region32
      $region31: #{tpu_custom_call.1} parent=5 // pred_region
        %s220 = ssub.s32 %s16, 1
        // Predicated region
        $region33: #{tpu_custom_call.1} parent=31 // pred_check
          %p221 = pneg %p49
        $region34: #{tpu_custom_call.1} parent=31 // pred_check_branch
          %223 = sbr.rel (%p221) target = $region36
        $region35: #{tpu_custom_call.1} parent=31 // pred_region
          %224 = dma.done [#allocation4], 1024
        $region36: #{tpu_custom_call.1} parent=31 // pred_fallthru
          _
        %s225 = sand.u32 %s21, 1
        %s226 = scalar_lea.sflag [#allocation7], %s225
        %s227 = sand.u32 %s64, 1
        %s228 = smul.addr %s227, 64
        %s229 = scalar_lea.vmem [#allocation6], %s228
        // Predicated region
        $region37: #{tpu_custom_call.1} parent=31 // pred_check
          %p230 = pneg %p77
        $region38: #{tpu_custom_call.1} parent=31 // pred_check_branch
          %232 = sbr.rel (%p230) target = $region40
        $region39: #{tpu_custom_call.1} parent=31 // pred_region
          %233 = dma.done %s226, 1024
        $region40: #{tpu_custom_call.1} parent=31 // pred_fallthru
          _
        %s234 = sand.u32 %s21, 1
        %s235 = scalar_lea.sflag [#allocation7], %s234
        %s236 = sand.u32 %s94, 1
        %s237 = smul.addr %s236, 64
        %s238 = scalar_lea.vmem [#allocation8], %s237
        // Predicated region
        $region41: #{tpu_custom_call.1} parent=31 // pred_check
          %p239 = pneg %p107
        $region42: #{tpu_custom_call.1} parent=31 // pred_check_branch
          %241 = sbr.rel (%p239) target = $region44
        $region43: #{tpu_custom_call.1} parent=31 // pred_region
          %242 = dma.done %s235, 1024
        $region44: #{tpu_custom_call.1} parent=31 // pred_fallthru
          _
        %p243 = pneg %p49
        %p244 = pneg %p46
        %s245 = sand.u32 %s21, 1
        %s246 = scalar_lea.sflag [#allocation7], %s245
        %s247 = sand.u32 %s64, 1
        %s248 = smul.addr %s247, 64
        %s249 = scalar_lea.vmem [#allocation6], %s248
        %p250 = pneg %p77
        %p251 = pneg %p74
        %s252 = sand.u32 %s21, 1
        %s253 = scalar_lea.sflag [#allocation7], %s252
        %s254 = sand.u32 %s94, 1
        %s255 = smul.addr %s254, 64
        %s256 = scalar_lea.vmem [#allocation8], %s255
        %p257 = pneg %p107
        %p258 = pneg %p104
        %p259 = pneg %p135
        %p260 = pneg %p132
        %s261 = sand.u32 %s122, 1
        %s262 = scalar_lea.sflag [#allocation5], %s261
        %s263 = sand.u32 %s122, 1
        %s264 = smul.addr %s263, 32
        %s265 = scalar_lea.vmem [#allocation9], %s264
        %s266 = smul.u32 16, %s26
        %s267 = sadd.s32 %s26, 1
        %s268 = smul.u32 16, %s267
        %v270 = vld [vmem:[%s229] sm:$0xf]
        %v271 = vld [vmem:[%s229 + $0x4] sm:$0xf]
        %v272 = vld [vmem:[%s229 + $0x8] sm:$0xf]
        %v273 = vld [vmem:[%s229 + $0xc] sm:$0xf]
        %v274 = vld [vmem:[%s229 + $0x10] sm:$0xf]
        %v275 = vld [vmem:[%s229 + $0x14] sm:$0xf]
        %v276 = vld [vmem:[%s229 + $0x18] sm:$0xf]
        %v277 = vld [vmem:[%s229 + $0x1c] sm:$0xf]
        %v278 = vld [vmem:[%s229 + $0x20] sm:$0xf]
        %v279 = vld [vmem:[%s229 + $0x24] sm:$0xf]
        %v280 = vld [vmem:[%s229 + $0x28] sm:$0xf]
        %v281 = vld [vmem:[%s229 + $0x2c] sm:$0xf]
        %v282 = vld [vmem:[%s229 + $0x30] sm:$0xf]
        %v283 = vld [vmem:[%s229 + $0x34] sm:$0xf]
        %v284 = vld [vmem:[%s229 + $0x38] sm:$0xf]
        %v285 = vld [vmem:[%s229 + $0x3c] sm:$0xf]
        %286 = vst [vmem:[#allocation2] sm:$0xf] %v270
        %287 = vst [vmem:[#allocation2 + $0x4] sm:$0xf] %v271
        %288 = vst [vmem:[#allocation2 + $0x8] sm:$0xf] %v272
        %289 = vst [vmem:[#allocation2 + $0xc] sm:$0xf] %v273
        %290 = vst [vmem:[#allocation2 + $0x10] sm:$0xf] %v274
        %291 = vst [vmem:[#allocation2 + $0x14] sm:$0xf] %v275
        %292 = vst [vmem:[#allocation2 + $0x18] sm:$0xf] %v276
        %293 = vst [vmem:[#allocation2 + $0x1c] sm:$0xf] %v277
        %294 = vst [vmem:[#allocation2 + $0x20] sm:$0xf] %v278
        %295 = vst [vmem:[#allocation2 + $0x24] sm:$0xf] %v279
        %296 = vst [vmem:[#allocation2 + $0x28] sm:$0xf] %v280
        %297 = vst [vmem:[#allocation2 + $0x2c] sm:$0xf] %v281
        %298 = vst [vmem:[#allocation2 + $0x30] sm:$0xf] %v282
        %299 = vst [vmem:[#allocation2 + $0x34] sm:$0xf] %v283
        %300 = vst [vmem:[#allocation2 + $0x38] sm:$0xf] %v284
        %301 = vst [vmem:[#allocation2 + $0x3c] sm:$0xf] %v285
        %v302 = vld [vmem:[%s238] sm:$0xf]
        %v303 = vld [vmem:[%s238 + $0x4] sm:$0xf]
        %v304 = vld [vmem:[%s238 + $0x8] sm:$0xf]
        %v305 = vld [vmem:[%s238 + $0xc] sm:$0xf]
        %v306 = vld [vmem:[%s238 + $0x10] sm:$0xf]
        %v307 = vld [vmem:[%s238 + $0x14] sm:$0xf]
        %v308 = vld [vmem:[%s238 + $0x18] sm:$0xf]
        %v309 = vld [vmem:[%s238 + $0x1c] sm:$0xf]
        %v310 = vld [vmem:[%s238 + $0x20] sm:$0xf]
        %v311 = vld [vmem:[%s238 + $0x24] sm:$0xf]
        %v312 = vld [vmem:[%s238 + $0x28] sm:$0xf]
        %v313 = vld [vmem:[%s238 + $0x2c] sm:$0xf]
        %v314 = vld [vmem:[%s238 + $0x30] sm:$0xf]
        %v315 = vld [vmem:[%s238 + $0x34] sm:$0xf]
        %v316 = vld [vmem:[%s238 + $0x38] sm:$0xf]
        %v317 = vld [vmem:[%s238 + $0x3c] sm:$0xf]
        %318 = vst [vmem:[#allocation2 + $0x40] sm:$0xf] %v302
        %319 = vst [vmem:[#allocation2 + $0x44] sm:$0xf] %v303
        %320 = vst [vmem:[#allocation2 + $0x48] sm:$0xf] %v304
        %321 = vst [vmem:[#allocation2 + $0x4c] sm:$0xf] %v305
        %322 = vst [vmem:[#allocation2 + $0x50] sm:$0xf] %v306
        %323 = vst [vmem:[#allocation2 + $0x54] sm:$0xf] %v307
        %324 = vst [vmem:[#allocation2 + $0x58] sm:$0xf] %v308
        %325 = vst [vmem:[#allocation2 + $0x5c] sm:$0xf] %v309
        %326 = vst [vmem:[#allocation2 + $0x60] sm:$0xf] %v310
        %327 = vst [vmem:[#allocation2 + $0x64] sm:$0xf] %v311
        %328 = vst [vmem:[#allocation2 + $0x68] sm:$0xf] %v312
        %329 = vst [vmem:[#allocation2 + $0x6c] sm:$0xf] %v313
        %330 = vst [vmem:[#allocation2 + $0x70] sm:$0xf] %v314
        %331 = vst [vmem:[#allocation2 + $0x74] sm:$0xf] %v315
        %332 = vst [vmem:[#allocation2 + $0x78] sm:$0xf] %v316
        %333 = vst [vmem:[#allocation2 + $0x7c] sm:$0xf] %v317
        %v334 = vld [vmem:[#allocation2] sm:$0xf]
        %v335 = vld [vmem:[#allocation2 + $0x4] sm:$0xf]
        %v336 = vld [vmem:[#allocation2 + $0x8] sm:$0xf]
        %v337 = vld [vmem:[#allocation2 + $0xc] sm:$0xf]
        %v338 = vld [vmem:[#allocation2 + $0x10] sm:$0xf]
        %v339 = vld [vmem:[#allocation2 + $0x14] sm:$0xf]
        %v340 = vld [vmem:[#allocation2 + $0x18] sm:$0xf]
        %v341 = vld [vmem:[#allocation2 + $0x1c] sm:$0xf]
        %v342 = vld [vmem:[#allocation2 + $0x20] sm:$0xf]
        %v343 = vld [vmem:[#allocation2 + $0x24] sm:$0xf]
        %v344 = vld [vmem:[#allocation2 + $0x28] sm:$0xf]
        %v345 = vld [vmem:[#allocation2 + $0x2c] sm:$0xf]
        %v346 = vld [vmem:[#allocation2 + $0x30] sm:$0xf]
        %v347 = vld [vmem:[#allocation2 + $0x34] sm:$0xf]
        %v348 = vld [vmem:[#allocation2 + $0x38] sm:$0xf]
        %v349 = vld [vmem:[#allocation2 + $0x3c] sm:$0xf]
        %v350 = vld [vmem:[#allocation2 + $0x40] sm:$0xf]
        %v351 = vld [vmem:[#allocation2 + $0x44] sm:$0xf]
        %v352 = vld [vmem:[#allocation2 + $0x48] sm:$0xf]
        %v353 = vld [vmem:[#allocation2 + $0x4c] sm:$0xf]
        %v354 = vld [vmem:[#allocation2 + $0x50] sm:$0xf]
        %v355 = vld [vmem:[#allocation2 + $0x54] sm:$0xf]
        %v356 = vld [vmem:[#allocation2 + $0x58] sm:$0xf]
        %v357 = vld [vmem:[#allocation2 + $0x5c] sm:$0xf]
        %v358 = vld [vmem:[#allocation2 + $0x60] sm:$0xf]
        %v359 = vld [vmem:[#allocation2 + $0x64] sm:$0xf]
        %v360 = vld [vmem:[#allocation2 + $0x68] sm:$0xf]
        %v361 = vld [vmem:[#allocation2 + $0x6c] sm:$0xf]
        %v362 = vld [vmem:[#allocation2 + $0x70] sm:$0xf]
        %v363 = vld [vmem:[#allocation2 + $0x74] sm:$0xf]
        %v364 = vld [vmem:[#allocation2 + $0x78] sm:$0xf]
        %v365 = vld [vmem:[#allocation2 + $0x7c] sm:$0xf]
        %v366 = vld [vmem:[#allocation3] sm:$0xf]
        %v367 = vld [vmem:[#allocation3 + $0x4] sm:$0xf]
        %v368 = vld [vmem:[#allocation3 + $0x8] sm:$0xf]
        %v369 = vld [vmem:[#allocation3 + $0xc] sm:$0xf]
        %v370 = vld [vmem:[#allocation3 + $0x10] sm:$0xf]
        %v371 = vld [vmem:[#allocation3 + $0x14] sm:$0xf]
        %v372 = vld [vmem:[#allocation3 + $0x18] sm:$0xf]
        %v373 = vld [vmem:[#allocation3 + $0x1c] sm:$0xf]
        %v374 = vld [vmem:[#allocation3 + $0x20] sm:$0xf]
        %v375 = vld [vmem:[#allocation3 + $0x24] sm:$0xf]
        %v376 = vld [vmem:[#allocation3 + $0x28] sm:$0xf]
        %v377 = vld [vmem:[#allocation3 + $0x2c] sm:$0xf]
        %v378 = vld [vmem:[#allocation3 + $0x30] sm:$0xf]
        %v379 = vld [vmem:[#allocation3 + $0x34] sm:$0xf]
        %v380 = vld [vmem:[#allocation3 + $0x38] sm:$0xf]
        %v381 = vld [vmem:[#allocation3 + $0x3c] sm:$0xf]
        %v398 = vunpack.c.l.b16 %v366
        %v399 = vunpack.c.l.b16 %v367
        %v400 = vunpack.c.l.b16 %v368
        %v401 = vunpack.c.l.b16 %v369
        %v402 = vunpack.c.l.b16 %v370
        %v403 = vunpack.c.l.b16 %v371
        %v404 = vunpack.c.l.b16 %v372
        %v405 = vunpack.c.l.b16 %v373
        %v406 = vunpack.c.l.b16 %v374
        %v407 = vunpack.c.l.b16 %v375
        %v408 = vunpack.c.l.b16 %v376
        %v409 = vunpack.c.l.b16 %v377
        %v410 = vunpack.c.l.b16 %v378
        %v411 = vunpack.c.l.b16 %v379
        %v412 = vunpack.c.l.b16 %v380
        %v413 = vunpack.c.l.b16 %v381
        %v414 = vpack.c.b16 %v399, %v398
        %v415 = vpack.c.b16 %v401, %v400
        %v416 = vpack.c.b16 %v403, %v402
        %v417 = vpack.c.b16 %v405, %v404
        %v418 = vpack.c.b16 %v407, %v406
        %v419 = vpack.c.b16 %v409, %v408
        %v420 = vpack.c.b16 %v411, %v410
        %v421 = vpack.c.b16 %v413, %v412
        %v462 = vunpack.c.l.b16 %v334
        %v463 = vunpack.c.l.b16 %v335
        %v464 = vunpack.c.l.b16 %v336
        %v465 = vunpack.c.l.b16 %v337
        %v466 = vunpack.c.l.b16 %v338
        %v467 = vunpack.c.l.b16 %v339
        %v468 = vunpack.c.l.b16 %v340
        %v469 = vunpack.c.l.b16 %v341
        %v470 = vunpack.c.l.b16 %v342
        %v471 = vunpack.c.l.b16 %v343
        %v472 = vunpack.c.l.b16 %v344
        %v473 = vunpack.c.l.b16 %v345
        %v474 = vunpack.c.l.b16 %v346
        %v475 = vunpack.c.l.b16 %v347
        %v476 = vunpack.c.l.b16 %v348
        %v477 = vunpack.c.l.b16 %v349
        %v478 = vunpack.c.l.b16 %v350
        %v479 = vunpack.c.l.b16 %v351
        %v480 = vunpack.c.l.b16 %v352
        %v481 = vunpack.c.l.b16 %v353
        %v482 = vunpack.c.l.b16 %v354
        %v483 = vunpack.c.l.b16 %v355
        %v484 = vunpack.c.l.b16 %v356
        %v485 = vunpack.c.l.b16 %v357
        %v486 = vunpack.c.l.b16 %v358
        %v487 = vunpack.c.l.b16 %v359
        %v488 = vunpack.c.l.b16 %v360
        %v489 = vunpack.c.l.b16 %v361
        %v490 = vunpack.c.l.b16 %v362
        %v491 = vunpack.c.l.b16 %v363
        %v492 = vunpack.c.l.b16 %v364
        %v493 = vunpack.c.l.b16 %v365
        %v494 = vpack.c.b16 %v463, %v462
        %v495 = vpack.c.b16 %v465, %v464
        %v496 = vpack.c.b16 %v467, %v466
        %v497 = vpack.c.b16 %v469, %v468
        %v498 = vpack.c.b16 %v471, %v470
        %v499 = vpack.c.b16 %v473, %v472
        %v500 = vpack.c.b16 %v475, %v474
        %v501 = vpack.c.b16 %v477, %v476
        %v502 = vpack.c.b16 %v479, %v478
        %v503 = vpack.c.b16 %v481, %v480
        %v504 = vpack.c.b16 %v483, %v482
        %v505 = vpack.c.b16 %v485, %v484
        %v506 = vpack.c.b16 %v487, %v486
        %v507 = vpack.c.b16 %v489, %v488
        %v508 = vpack.c.b16 %v491, %v490
        %v509 = vpack.c.b16 %v493, %v492
        %526 = vmatprep.subr.bf16.mxu0 0
        %527 = vmatpush1.bf16.xpose.msra.mxu0 %v501
        %528 = vmatprep.subr.bf16.mxu0 0
        %529 = vmatpush1.bf16.xpose.msra.mxu0 %v500
        %530 = vmatprep.subr.bf16.mxu0 0
        %531 = vmatpush1.bf16.xpose.msra.mxu0 %v499
        %532 = vmatprep.subr.bf16.mxu0 0
        %533 = vmatpush1.bf16.xpose.msra.mxu0 %v498
        %534 = vmatprep.subr.bf16.mxu0 0
        %535 = vmatpush1.bf16.xpose.msra.mxu0 %v497
        %536 = vmatprep.subr.bf16.mxu0 0
        %537 = vmatpush1.bf16.xpose.msra.mxu0 %v496
        %538 = vmatprep.subr.bf16.mxu0 0
        %539 = vmatpush1.bf16.xpose.msra.mxu0 %v495
        %540 = vmatprep.subr.bf16.mxu0 0
        %541 = vmatpush1.bf16.xpose.msra.mxu0 %v494
        %542 = vmatprep.subr.bf16.mxu0 0
        %543 = vmatpush2.bf16.xpose.msra.mxu0 %v509
        %544 = vmatprep.subr.bf16.mxu0 0
        %545 = vmatpush2.bf16.xpose.msra.mxu0 %v508
        %546 = vmatprep.subr.bf16.mxu0 0
        %547 = vmatpush2.bf16.xpose.msra.mxu0 %v507
        %548 = vmatprep.subr.bf16.mxu0 0
        %549 = vmatpush2.bf16.xpose.msra.mxu0 %v506
        %550 = vmatprep.subr.bf16.mxu0 0
        %551 = vmatpush2.bf16.xpose.msra.mxu0 %v505
        %552 = vmatprep.subr.bf16.mxu0 0
        %553 = vmatpush2.bf16.xpose.msra.mxu0 %v504
        %554 = vmatprep.subr.bf16.mxu0 0
        %555 = vmatpush2.bf16.xpose.msra.mxu0 %v503
        %556 = vmatprep.subr.bf16.mxu0 0
        %557 = vmatpush2.bf16.xpose.msra.mxu0 %v502
        %558 = vmatprep.mubr.bf16.mxu0 0
        %559 = vmatmul.mubr.bf16.gmra.mxu0 %v414
        %v560 = vpop.f32.mrf.mxu0
        %v561 = vadd.f32 0.0, %v560
        %v562 = vpop.f32.mrf.mxu0
        %v563 = vpop.f32.mrf.mxu0
        %v564 = vadd.f32 0.0, %v563
        %v565 = vpop.f32.mrf.mxu0
        %566 = vmatprep.mubr.bf16.mxu0 0
        %567 = vmatmul.mubr.bf16.gmra.mxu0 %v415
        %v568 = vpop.f32.mrf.mxu0
        %v569 = vadd.f32 0.0, %v568
        %v570 = vpop.f32.mrf.mxu0
        %v571 = vpop.f32.mrf.mxu0
        %v572 = vadd.f32 0.0, %v571
        %v573 = vpop.f32.mrf.mxu0
        %574 = vmatprep.mubr.bf16.mxu0 0
        %575 = vmatmul.mubr.bf16.gmra.mxu0 %v416
        %v576 = vpop.f32.mrf.mxu0
        %v577 = vadd.f32 0.0, %v576
        %v578 = vpop.f32.mrf.mxu0
        %v579 = vadd.f32 0.0, %v578
        %v580 = vpop.f32.mrf.mxu0
        %v581 = vadd.f32 0.0, %v580
        %v582 = vpop.f32.mrf.mxu0
        %v583 = vadd.f32 0.0, %v582
        %584 = vmatprep.mubr.bf16.mxu0 0
        %585 = vmatmul.mubr.bf16.gmra.mxu0 %v417
        %v586 = vpop.f32.mrf.mxu0
        %v587 = vadd.f32 0.0, %v586
        %v588 = vpop.f32.mrf.mxu0
        %v589 = vadd.f32 0.0, %v588
        %v590 = vpop.f32.mrf.mxu0
        %v591 = vadd.f32 0.0, %v590
        %v592 = vpop.f32.mrf.mxu0
        %v593 = vadd.f32 0.0, %v592
        %594 = vmatprep.mubr.bf16.mxu0 0
        %595 = vmatmul.mubr.bf16.gmra.mxu0 %v418
        %v596 = vpop.f32.mrf.mxu0
        %v597 = vadd.f32 0.0, %v596
        %v598 = vpop.f32.mrf.mxu0
        %v599 = vadd.f32 0.0, %v598
        %v600 = vpop.f32.mrf.mxu0
        %v601 = vadd.f32 0.0, %v600
        %v602 = vpop.f32.mrf.mxu0
        %v603 = vadd.f32 0.0, %v602
        %604 = vmatprep.mubr.bf16.mxu0 0
        %605 = vmatmul.mubr.bf16.gmra.mxu0 %v419
        %v606 = vpop.f32.mrf.mxu0
        %v607 = vadd.f32 0.0, %v606
        %v608 = vpop.f32.mrf.mxu0
        %v609 = vadd.f32 0.0, %v608
        %v610 = vpop.f32.mrf.mxu0
        %v611 = vadd.f32 0.0, %v610
        %v612 = vpop.f32.mrf.mxu0
        %v613 = vadd.f32 0.0, %v612
        %614 = vmatprep.mubr.bf16.mxu0 0
        %615 = vmatmul.mubr.bf16.gmra.mxu0 %v420
        %v616 = vpop.f32.mrf.mxu0
        %v617 = vadd.f32 0.0, %v616
        %v618 = vpop.f32.mrf.mxu0
        %v619 = vadd.f32 0.0, %v618
        %v620 = vpop.f32.mrf.mxu0
        %v621 = vadd.f32 0.0, %v620
        %v622 = vpop.f32.mrf.mxu0
        %v623 = vadd.f32 0.0, %v622
        %624 = vmatprep.mubr.bf16.mxu0 0
        %625 = vmatmul.mubr.bf16.gmra.mxu0 %v421
        %v626 = vpop.f32.mrf.mxu0
        %v627 = vadd.f32 0.0, %v626
        %v628 = vpop.f32.mrf.mxu0
        %v629 = vadd.f32 0.0, %v628
        %v630 = vpop.f32.mrf.mxu0
        %v631 = vadd.f32 0.0, %v630
        %v632 = vpop.f32.mrf.mxu0
        %v633 = vadd.f32 0.0, %v632
        %634 = vdwg.mxu0
        %635 = vrot.lane.b32.xlu0 %v577, 127
        %v636 = vpop.permute.xlu0 %635
        %637 = vrot.lane.b32.xlu0 %v581, 127
        %v638 = vpop.permute.xlu0 %637
        %639 = vrot.lane.b32.xlu0 %v587, 127
        %v640 = vpop.permute.xlu0 %639
        %641 = vrot.lane.b32.xlu0 %v591, 127
        %v642 = vpop.permute.xlu0 %641
        %643 = vrot.lane.b32.xlu0 %v579, 127
        %v644 = vpop.permute.xlu0 %643
        %645 = vrot.lane.b32.xlu0 %v583, 127
        %v646 = vpop.permute.xlu0 %645
        %647 = vrot.lane.b32.xlu0 %v589, 127
        %v648 = vpop.permute.xlu0 %647
        %649 = vrot.lane.b32.xlu0 %v593, 127
        %v650 = vpop.permute.xlu0 %649
        %v651 = vlaneseq
        %v652 = vand.u32 %v651, 127
        %vm653 = vcmp.lt.s32.totalorder %v652, 127
        %v654 = vsel %vm653, %v636, %v644
        %v655 = vsel %vm653, %v638, %v646
        %v656 = vsel %vm653, %v640, %v648
        %v657 = vsel %vm653, %v642, %v650
        %v658 = vadd.f32 %v561, %v654
        %v659 = vadd.f32 %v564, %v655
        %v660 = vadd.f32 %v569, %v656
        %v661 = vadd.f32 %v572, %v657
        %662 = vrot.lane.b32.xlu0 %v597, 126
        %v663 = vpop.permute.xlu0 %662
        %664 = vrot.lane.b32.xlu0 %v601, 126
        %v665 = vpop.permute.xlu0 %664
        %666 = vrot.lane.b32.xlu0 %v607, 126
        %v667 = vpop.permute.xlu0 %666
        %668 = vrot.lane.b32.xlu0 %v611, 126
        %v669 = vpop.permute.xlu0 %668
        %670 = vrot.lane.b32.xlu0 %v599, 126
        %v671 = vpop.permute.xlu0 %670
        %672 = vrot.lane.b32.xlu0 %v603, 126
        %v673 = vpop.permute.xlu0 %672
        %674 = vrot.lane.b32.xlu0 %v609, 126
        %v675 = vpop.permute.xlu0 %674
        %676 = vrot.lane.b32.xlu0 %v613, 126
        %v677 = vpop.permute.xlu0 %676
        %vm678 = vcmp.lt.s32.totalorder %v652, 126
        %v679 = vsel %vm678, %v663, %v671
        %v680 = vsel %vm678, %v665, %v673
        %v681 = vsel %vm678, %v667, %v675
        %v682 = vsel %vm678, %v669, %v677
        %v683 = vadd.f32 %v658, %v679
        %v684 = vadd.f32 %v659, %v680
        %v685 = vadd.f32 %v660, %v681
        %v686 = vadd.f32 %v661, %v682
        %687 = vrot.lane.b32.xlu0 %v617, 125
        %v688 = vpop.permute.xlu0 %687
        %689 = vrot.lane.b32.xlu0 %v621, 125
        %v690 = vpop.permute.xlu0 %689
        %691 = vrot.lane.b32.xlu0 %v627, 125
        %v692 = vpop.permute.xlu0 %691
        %693 = vrot.lane.b32.xlu0 %v631, 125
        %v694 = vpop.permute.xlu0 %693
        %695 = vrot.lane.b32.xlu0 %v619, 125
        %v696 = vpop.permute.xlu0 %695
        %697 = vrot.lane.b32.xlu0 %v623, 125
        %v698 = vpop.permute.xlu0 %697
        %699 = vrot.lane.b32.xlu0 %v629, 125
        %v700 = vpop.permute.xlu0 %699
        %701 = vrot.lane.b32.xlu0 %v633, 125
        %v702 = vpop.permute.xlu0 %701
        %vm703 = vcmp.lt.s32.totalorder %v652, 125
        %v704 = vsel %vm703, %v688, %v696
        %v705 = vsel %vm703, %v690, %v698
        %v706 = vsel %vm703, %v692, %v700
        %v707 = vsel %vm703, %v694, %v702
        %v708 = vadd.f32 %v683, %v704
        %v709 = vadd.f32 %v684, %v705
        %v710 = vadd.f32 %v685, %v706
        %v711 = vadd.f32 %v686, %v707
        %712 = vst [vmem:[%s265] sm:$0xff] %v708
        %713 = vst [vmem:[%s265 + $0x8] sm:$0xff] %v709
        %714 = vst [vmem:[%s265 + $0x10] sm:$0xff] %v710
        %715 = vst [vmem:[%s265 + $0x18] sm:$0xff] %v711
        %s716 = sand.u32 %s122, 1
        %s717 = scalar_lea.sflag [#allocation5], %s716
        %s718 = sand.u32 %s122, 1
        %s719 = smul.addr %s718, 32
        %s720 = scalar_lea.vmem [#allocation9], %s719
        // Predicated region
        $region45: #{tpu_custom_call.1} parent=31 // pred_check
          %p721 = pneg %p132
        $region46: #{tpu_custom_call.1} parent=31 // pred_check_branch
          %723 = sbr.rel (%p721) target = $region48
        $region47: #{tpu_custom_call.1} parent=31 // pred_region
          %s725 = ssub.s32 512, 512
          %726 = vsyncadd %s717, %s725
          %s727 = smul.addr %s25, 4
          %s728 = sadd.s32 %s26, %s727
          %s729 = smul.addr %s728, 128
          %s730 = scalar_lea.hbm %s3, %s729
          %s731 = sshll.u32 %s720, 4
          %s732 = int_to_ptr.vmem [resolvable:$true] %s731
          %737 = dma.vmem_to_hbm [thread:$0]  %s732, 512, %s730, %s717, 128, 128, 8
        $region48: #{tpu_custom_call.1} parent=31 // pred_fallthru
          _
      $region32: #{tpu_custom_call.1} parent=5 // pred_fallthru
        _
      %p738 = scmp.le.s32.totalorder 2, %s16
      // Predicated region
      $region49: #{tpu_custom_call.1} parent=5 // pred_check
        %p739 = pneg %p738
      $region50: #{tpu_custom_call.1} parent=5 // pred_check_branch
        %741 = sbr.rel (%p739) target = $region52
      $region51: #{tpu_custom_call.1} parent=5 // pred_region
        %s742 = ssub.s32 %s16, 2
        // Predicated region
        $region53: #{tpu_custom_call.1} parent=51 // pred_check
          %p743 = pneg %p138
        $region54: #{tpu_custom_call.1} parent=51 // pred_check_branch
          %745 = sbr.rel (%p743) target = $region56
        $region55: #{tpu_custom_call.1} parent=51 // pred_region
          %s746 = sand.u32 %s123, 1
          %s747 = scalar_lea.sflag [#allocation5], %s746
          %s748 = sand.u32 %s123, 1
          %s749 = smul.addr %s748, 32
          %s750 = scalar_lea.vmem [#allocation9], %s749
          %751 = dma.done %s747, 512
        $region56: #{tpu_custom_call.1} parent=51 // pred_fallthru
          _
      $region52: #{tpu_custom_call.1} parent=5 // pred_fallthru
        _
    $region6: #{tpu_custom_call.1} parent=1 // loop_footer
      %s20 = sadd.s32 1, %s16
    $region7: #{tpu_custom_call.1} parent=1 // loop_footer_branch
      %15 = sbr.rel target = $region3
    $region8: #{tpu_custom_call.1} parent=1 // loop_exit
      _
    %752 = vsyncpa [#allocation4], 1
    %s753 = scalar_lea.sflag [#allocation4], 1
    %754 = vsyncpa %s753, 1
    %755 = vsyncpa [#allocation7], 1
    %s756 = scalar_lea.sflag [#allocation7], 1
    %757 = vsyncpa %s756, 1
    %758 = vsyncpa [#allocation5], 1
    %s759 = scalar_lea.sflag [#allocation5], 1
    %760 = vsyncpa %s759, 1

</llo_original>
